<compile_context>
chip_gen: v5e
topology: v5e:2x2
jax: 0.10.0
libtpu: 0.0.40
codegen_flags: <defaults>
</compile_context>

<pallas_src>
import jax
import jax.numpy as jnp
from jax.experimental import pallas as pl
from jax.experimental.pallas import tpu as pltpu  # noqa: F401  (kept for TPU-specific tuning hooks)

D_MODEL = 32
NHEAD = 4
DFF = 64          # dim_feedforward (small synthetic value; module default is 1024)
SEQ = 8
BATCH = 2
EPS = 1e-5        # nn.LayerNorm default
HEAD_DIM = D_MODEL // NHEAD


def _layer_norm(x, g, b):
    mu = jnp.mean(x, axis=-1, keepdims=True)
    var = jnp.mean((x - mu) ** 2, axis=-1, keepdims=True)
    return (x - mu) * jax.lax.rsqrt(var + EPS) * g + b


def encoder_layer_kernel(src_ref, pos_ref,
                         wqk_ref, bqk_ref,      # fused q/k proj (E, 2E), (1, 2E); scale folded in q half
                         wv_ref, bv_ref,        # v proj (E, E), (1, E)
                         wo_ref, bo_ref,        # out proj (E, E), (1, E)
                         w1_ref, b1_ref,        # linear1 (E, DFF), (1, DFF)
                         w2_ref, b2_ref,        # linear2 (DFF, E), (1, E)
                         g1_ref, beta1_ref,     # norm1 (1, E), (1, E)
                         g2_ref, beta2_ref,     # norm2 (1, E), (1, E)
                         out_ref):
    E = D_MODEL
    hd = HEAD_DIM

    x = src_ref[...]                         # (B*S, E), batch-major rows
    qk_in = x + pos_ref[...]                 # q = k = src + pos

    # Fused Q/K projection (single MXU GEMM, weights already transposed) + V projection.
    QK = jnp.dot(qk_in, wqk_ref[...], preferred_element_type=jnp.float32) + bqk_ref[...]
    Vp = jnp.dot(x, wv_ref[...], preferred_element_type=jnp.float32) + bv_ref[...]

    # Leading-dim split only (lane dim untouched) -> cheap, layout-preserving reshapes.
    Q = QK[:, :E].reshape(BATCH, SEQ, E)     # already scaled by 1/sqrt(hd)
    K = QK[:, E:].reshape(BATCH, SEQ, E)
    V = Vp.reshape(BATCH, SEQ, E)

    head_outs = []
    for h in range(NHEAD):                   # static loop over heads, batched over B via einsum
        qh = Q[:, :, h * hd:(h + 1) * hd]
        kh = K[:, :, h * hd:(h + 1) * hd]
        vh = V[:, :, h * hd:(h + 1) * hd]
        s = jnp.einsum('bqd,bkd->bqk', qh, kh, preferred_element_type=jnp.float32)
        s = s - jnp.max(s, axis=-1, keepdims=True)
        e = jnp.exp(s)
        p = e * pl.reciprocal(jnp.sum(e, axis=-1, keepdims=True), approx=True)
        head_outs.append(
            jnp.einsum('bqk,bkd->bqd', p, vh, preferred_element_type=jnp.float32))
    attn = jnp.concatenate(head_outs, axis=-1).reshape(BATCH * SEQ, E)

    attn = jnp.dot(attn, wo_ref[...], preferred_element_type=jnp.float32) + bo_ref[...]

    # TODO(synk): dropout / dropout1 / dropout2 treated as identity (eval mode).
    y = _layer_norm(x + attn, g1_ref[...], beta1_ref[...])

    h1 = jnp.maximum(
        jnp.dot(y, w1_ref[...], preferred_element_type=jnp.float32) + b1_ref[...], 0.0)
    ff = jnp.dot(h1, w2_ref[...], preferred_element_type=jnp.float32) + b2_ref[...]
    y = _layer_norm(y + ff, g2_ref[...], beta2_ref[...])

    out_ref[...] = y


@jax.jit
def transformer_encoder_layer(src, pos, params):
    """src, pos: (S, B, E) float32 — PyTorch seq-first layout. Returns (S, B, E)."""
    S, B, E = src.shape
    x2 = jnp.transpose(src, (1, 0, 2)).reshape(B * S, E)
    p2 = jnp.transpose(pos, (1, 0, 2)).reshape(B * S, E)

    # Wrapper-side (one-time, jitted) weight plumbing: transpose, split, fuse Q/K, fold scale.
    scale = 1.0 / float(E // NHEAD) ** 0.5
    w_in, b_in = params["w_in"], params["b_in"]
    wq_t = w_in[0:E, :].T * scale
    wk_t = w_in[E:2 * E, :].T
    wv_t = w_in[2 * E:3 * E, :].T
    bq = b_in[:, 0:E] * scale
    bk = b_in[:, E:2 * E]
    bv = b_in[:, 2 * E:3 * E]
    wqk = jnp.concatenate([wq_t, wk_t], axis=1)   # (E, 2E)
    bqk = jnp.concatenate([bq, bk], axis=1)       # (1, 2E)

    out2 = pl.pallas_call(
        encoder_layer_kernel,
        out_shape=jax.ShapeDtypeStruct((B * S, E), jnp.float32),
    )(x2, p2,
      wqk, bqk,
      wv_t, bv,
      params["wo"].T, params["bo"],
      params["w1"].T, params["b1"],
      params["w2"].T, params["b2"],
      params["g1"], params["beta1"],
      params["g2"], params["beta2"])

    return jnp.transpose(out2.reshape(B, S, E), (1, 0, 2))


# ---------------- pure-JAX reference (same math, no Pallas) ----------------
def reference(src, pos, params):
    E = D_MODEL
    hd = HEAD_DIM
    scale = 1.0 / float(hd) ** 0.5

    def one(x, p):                                  # x, p: (S, E)
        qk_in = x + p
        w_in, b_in = params["w_in"], params["b_in"]
        wq, wk, wv = w_in[0:E], w_in[E:2 * E], w_in[2 * E:3 * E]
        bq, bk, bv = b_in[:, 0:E], b_in[:, E:2 * E], b_in[:, 2 * E:3 * E]
        Q = qk_in @ wq.T + bq
        K = qk_in @ wk.T + bk
        V = x @ wv.T + bv
        outs = []
        for h in range(NHEAD):
            qh = Q[:, h * hd:(h + 1) * hd] * scale
            kh = K[:, h * hd:(h + 1) * hd]
            vh = V[:, h * hd:(h + 1) * hd]
            a = jax.nn.softmax(qh @ kh.T, axis=-1)
            outs.append(a @ vh)
        attn = jnp.concatenate(outs, axis=-1) @ params["wo"].T + params["bo"]
        y = x + attn
        y = _layer_norm(y, params["g1"], params["beta1"])
        ff = jnp.maximum(y @ params["w1"].T + params["b1"], 0.0) @ params["w2"].T \
            + params["b2"]
        y = y + ff
        y = _layer_norm(y, params["g2"], params["beta2"])
        return y

    src_b = jnp.transpose(src, (1, 0, 2))
    pos_b = jnp.transpose(pos, (1, 0, 2))
    out = jax.vmap(one)(src_b, pos_b)
    return jnp.transpose(out, (1, 0, 2))


def init_params(key):
    ks = jax.random.split(key, 8)
    return {
        "w_in": jax.random.normal(ks[0], (3 * D_MODEL, D_MODEL), jnp.float32) * 0.1,
        "b_in": jax.random.normal(ks[1], (1, 3 * D_MODEL), jnp.float32) * 0.01,
        "wo":   jax.random.normal(ks[2], (D_MODEL, D_MODEL), jnp.float32) * 0.1,
        "bo":   jax.random.normal(ks[3], (1, D_MODEL), jnp.float32) * 0.01,
        "w1":   jax.random.normal(ks[4], (DFF, D_MODEL), jnp.float32) * 0.1,
        "b1":   jax.random.normal(ks[5], (1, DFF), jnp.float32) * 0.01,
        "w2":   jax.random.normal(ks[6], (D_MODEL, DFF), jnp.float32) * 0.1,
        "b2":   jax.random.normal(ks[7], (1, D_MODEL), jnp.float32) * 0.01,
        "g1":    jnp.ones((1, D_MODEL), jnp.float32),
        "beta1": jnp.zeros((1, D_MODEL), jnp.float32),
        "g2":    jnp.ones((1, D_MODEL), jnp.float32),
        "beta2": jnp.zeros((1, D_MODEL), jnp.float32),
    }


if __name__ == "__main__":
    key = jax.random.PRNGKey(0)
    k_src, k_pos, k_par = jax.random.split(key, 3)
    src = jax.random.normal(k_src, (SEQ, BATCH, D_MODEL), jnp.float32)
    pos = jax.random.normal(k_pos, (SEQ, BATCH, D_MODEL), jnp.float32)
    params = init_params(k_par)

    out = transformer_encoder_layer(src, pos, params)
    out = jax.block_until_ready(out)

    ref = jax.block_until_ready(reference(src, pos, params))
    assert out.shape == (SEQ, BATCH, D_MODEL)
    # Tolerance slightly relaxed vs 1e-4 because the kernel uses the EUP approx
    # reciprocal for the softmax normalization.
    assert jnp.allclose(out, ref, atol=5e-3, rtol=5e-3), \
        f"max err {jnp.max(jnp.abs(out - ref))}"
    print("KERNEL_OK")
</pallas_src>

<mosaic_0001>
module attributes {stable_mosaic.version = 11 : i64} {
  func.func @encoder_layer_kernel(%arg0: memref<16x32xf32, #tpu.memory_space<vmem>>, %arg1: memref<16x32xf32, #tpu.memory_space<vmem>>, %arg2: memref<32x64xf32, #tpu.memory_space<vmem>>, %arg3: memref<1x64xf32, #tpu.memory_space<vmem>>, %arg4: memref<32x32xf32, #tpu.memory_space<vmem>>, %arg5: memref<1x32xf32, #tpu.memory_space<vmem>>, %arg6: memref<32x32xf32, #tpu.memory_space<vmem>>, %arg7: memref<1x32xf32, #tpu.memory_space<vmem>>, %arg8: memref<32x64xf32, #tpu.memory_space<vmem>>, %arg9: memref<1x64xf32, #tpu.memory_space<vmem>>, %arg10: memref<64x32xf32, #tpu.memory_space<vmem>>, %arg11: memref<1x32xf32, #tpu.memory_space<vmem>>, %arg12: memref<1x32xf32, #tpu.memory_space<vmem>>, %arg13: memref<1x32xf32, #tpu.memory_space<vmem>>, %arg14: memref<1x32xf32, #tpu.memory_space<vmem>>, %arg15: memref<1x32xf32, #tpu.memory_space<vmem>>, %arg16: memref<16x32xf32, #tpu.memory_space<vmem>>) attributes {dimension_semantics = [], scalar_prefetch = 0 : i64, scratch_operands = 0 : i64, tpu.core_type = #tpu.core_type<tc>} {
    %c0 = arith.constant 0 : index
    %c0_0 = arith.constant 0 : index
    %0 = vector.load %arg0[%c0, %c0_0] : memref<16x32xf32, #tpu.memory_space<vmem>>, vector<16x32xf32>
    %c0_1 = arith.constant 0 : index
    %c0_2 = arith.constant 0 : index
    %1 = vector.load %arg1[%c0_1, %c0_2] : memref<16x32xf32, #tpu.memory_space<vmem>>, vector<16x32xf32>
    %2 = arith.addf %0, %1 : vector<16x32xf32>
    %c0_3 = arith.constant 0 : index
    %c0_4 = arith.constant 0 : index
    %3 = vector.load %arg2[%c0_3, %c0_4] : memref<32x64xf32, #tpu.memory_space<vmem>>, vector<32x64xf32>
    %cst = arith.constant dense<0.000000e+00> : vector<16x64xf32>
    %4 = tpu.matmul %2, %3, %cst {dimension_numbers = #tpu.dot_dimension_numbers<[1], [0], [0], [1], [0, 0, 1, 1], [], []>} : vector<16x32xf32>, vector<32x64xf32>, vector<16x64xf32> -> vector<16x64xf32>
    %c0_5 = arith.constant 0 : index
    %c0_6 = arith.constant 0 : index
    %5 = vector.load %arg3[%c0_5, %c0_6] : memref<1x64xf32, #tpu.memory_space<vmem>>, vector<1x64xf32>
    %6 = vector.broadcast %5 : vector<1x64xf32> to vector<16x64xf32>
    %7 = arith.addf %4, %6 : vector<16x64xf32>
    %c0_7 = arith.constant 0 : index
    %c0_8 = arith.constant 0 : index
    %8 = vector.load %arg4[%c0_7, %c0_8] : memref<32x32xf32, #tpu.memory_space<vmem>>, vector<32x32xf32>
    %cst_9 = arith.constant dense<0.000000e+00> : vector<16x32xf32>
    %9 = tpu.matmul %0, %8, %cst_9 {dimension_numbers = #tpu.dot_dimension_numbers<[1], [0], [0], [1], [0, 0, 1, 1], [], []>} : vector<16x32xf32>, vector<32x32xf32>, vector<16x32xf32> -> vector<16x32xf32>
    %c0_10 = arith.constant 0 : index
    %c0_11 = arith.constant 0 : index
    %10 = vector.load %arg5[%c0_10, %c0_11] : memref<1x32xf32, #tpu.memory_space<vmem>>, vector<1x32xf32>
    %11 = vector.broadcast %10 : vector<1x32xf32> to vector<16x32xf32>
    %12 = arith.addf %9, %11 : vector<16x32xf32>
    %13 = vector.extract_strided_slice %7 {offsets = [0, 0], sizes = [16, 32], strides = [1, 1]} : vector<16x64xf32> to vector<16x32xf32>
    %14 = vector.shape_cast %13 : vector<16x32xf32> to vector<2x8x32xf32>
    %15 = vector.extract_strided_slice %7 {offsets = [0, 32], sizes = [16, 32], strides = [1, 1]} : vector<16x64xf32> to vector<16x32xf32>
    %16 = vector.shape_cast %15 : vector<16x32xf32> to vector<2x8x32xf32>
    %17 = vector.shape_cast %12 : vector<16x32xf32> to vector<2x8x32xf32>
    %18 = vector.extract_strided_slice %14 {offsets = [0, 0, 0], sizes = [2, 8, 8], strides = [1, 1, 1]} : vector<2x8x32xf32> to vector<2x8x8xf32>
    %19 = vector.extract_strided_slice %16 {offsets = [0, 0, 0], sizes = [2, 8, 8], strides = [1, 1, 1]} : vector<2x8x32xf32> to vector<2x8x8xf32>
    %20 = vector.extract_strided_slice %17 {offsets = [0, 0, 0], sizes = [2, 8, 8], strides = [1, 1, 1]} : vector<2x8x32xf32> to vector<2x8x8xf32>
    "tpu.trace_start"() <{level = 10 : i32, message = "bqd,bkd->bqk"}> : () -> ()
    %cst_12 = arith.constant dense<0.000000e+00> : vector<2x8x8xf32>
    %21 = tpu.matmul %18, %19, %cst_12 {dimension_numbers = #tpu.dot_dimension_numbers<[2], [2], [1], [1], [0, 0, 0, 1, 1, 1], [0], [0]>} : vector<2x8x8xf32>, vector<2x8x8xf32>, vector<2x8x8xf32> -> vector<2x8x8xf32>
    "tpu.trace_stop"() : () -> ()
    %cst_13 = arith.constant dense<0xFF800000> : vector<2x8xf32>
    %22 = vector.multi_reduction <maximumf>, %21, %cst_13 [2] : vector<2x8x8xf32> to vector<2x8xf32>
    %23 = vector.shape_cast %22 : vector<2x8xf32> to vector<2x8x1xf32>
    %24 = vector.broadcast %23 : vector<2x8x1xf32> to vector<2x8x8xf32>
    %25 = arith.subf %21, %24 : vector<2x8x8xf32>
    %26 = math.exp %25 : vector<2x8x8xf32>
    %cst_14 = arith.constant dense<0.000000e+00> : vector<2x8xf32>
    %27 = vector.multi_reduction <add>, %26, %cst_14 [2] : vector<2x8x8xf32> to vector<2x8xf32>
    %28 = vector.shape_cast %27 : vector<2x8xf32> to vector<2x8x1xf32>
    %29 = tpu.reciprocal %28 {approx = true} : vector<2x8x1xf32> -> vector<2x8x1xf32>
    %30 = vector.broadcast %29 : vector<2x8x1xf32> to vector<2x8x8xf32>
    %31 = arith.mulf %26, %30 : vector<2x8x8xf32>
    "tpu.trace_start"() <{level = 10 : i32, message = "bqk,bkd->bqd"}> : () -> ()
    %cst_15 = arith.constant dense<0.000000e+00> : vector<2x8x8xf32>
    %32 = tpu.matmul %31, %20, %cst_15 {dimension_numbers = #tpu.dot_dimension_numbers<[2], [1], [1], [2], [0, 0, 0, 1, 1, 2], [0], [0]>} : vector<2x8x8xf32>, vector<2x8x8xf32>, vector<2x8x8xf32> -> vector<2x8x8xf32>
    "tpu.trace_stop"() : () -> ()
    %33 = vector.extract_strided_slice %14 {offsets = [0, 0, 8], sizes = [2, 8, 8], strides = [1, 1, 1]} : vector<2x8x32xf32> to vector<2x8x8xf32>
    %34 = vector.extract_strided_slice %16 {offsets = [0, 0, 8], sizes = [2, 8, 8], strides = [1, 1, 1]} : vector<2x8x32xf32> to vector<2x8x8xf32>
    %35 = vector.extract_strided_slice %17 {offsets = [0, 0, 8], sizes = [2, 8, 8], strides = [1, 1, 1]} : vector<2x8x32xf32> to vector<2x8x8xf32>
    "tpu.trace_start"() <{level = 10 : i32, message = "bqd,bkd->bqk"}> : () -> ()
    %cst_16 = arith.constant dense<0.000000e+00> : vector<2x8x8xf32>
    %36 = tpu.matmul %33, %34, %cst_16 {dimension_numbers = #tpu.dot_dimension_numbers<[2], [2], [1], [1], [0, 0, 0, 1, 1, 1], [0], [0]>} : vector<2x8x8xf32>, vector<2x8x8xf32>, vector<2x8x8xf32> -> vector<2x8x8xf32>
    "tpu.trace_stop"() : () -> ()
    %cst_17 = arith.constant dense<0xFF800000> : vector<2x8xf32>
    %37 = vector.multi_reduction <maximumf>, %36, %cst_17 [2] : vector<2x8x8xf32> to vector<2x8xf32>
    %38 = vector.shape_cast %37 : vector<2x8xf32> to vector<2x8x1xf32>
    %39 = vector.broadcast %38 : vector<2x8x1xf32> to vector<2x8x8xf32>
    %40 = arith.subf %36, %39 : vector<2x8x8xf32>
    %41 = math.exp %40 : vector<2x8x8xf32>
    %cst_18 = arith.constant dense<0.000000e+00> : vector<2x8xf32>
    %42 = vector.multi_reduction <add>, %41, %cst_18 [2] : vector<2x8x8xf32> to vector<2x8xf32>
    %43 = vector.shape_cast %42 : vector<2x8xf32> to vector<2x8x1xf32>
    %44 = tpu.reciprocal %43 {approx = true} : vector<2x8x1xf32> -> vector<2x8x1xf32>
    %45 = vector.broadcast %44 : vector<2x8x1xf32> to vector<2x8x8xf32>
    %46 = arith.mulf %41, %45 : vector<2x8x8xf32>
    "tpu.trace_start"() <{level = 10 : i32, message = "bqk,bkd->bqd"}> : () -> ()
    %cst_19 = arith.constant dense<0.000000e+00> : vector<2x8x8xf32>
    %47 = tpu.matmul %46, %35, %cst_19 {dimension_numbers = #tpu.dot_dimension_numbers<[2], [1], [1], [2], [0, 0, 0, 1, 1, 2], [0], [0]>} : vector<2x8x8xf32>, vector<2x8x8xf32>, vector<2x8x8xf32> -> vector<2x8x8xf32>
    "tpu.trace_stop"() : () -> ()
    %48 = vector.extract_strided_slice %14 {offsets = [0, 0, 16], sizes = [2, 8, 8], strides = [1, 1, 1]} : vector<2x8x32xf32> to vector<2x8x8xf32>
    %49 = vector.extract_strided_slice %16 {offsets = [0, 0, 16], sizes = [2, 8, 8], strides = [1, 1, 1]} : vector<2x8x32xf32> to vector<2x8x8xf32>
    %50 = vector.extract_strided_slice %17 {offsets = [0, 0, 16], sizes = [2, 8, 8], strides = [1, 1, 1]} : vector<2x8x32xf32> to vector<2x8x8xf32>
    "tpu.trace_start"() <{level = 10 : i32, message = "bqd,bkd->bqk"}> : () -> ()
    %cst_20 = arith.constant dense<0.000000e+00> : vector<2x8x8xf32>
    %51 = tpu.matmul %48, %49, %cst_20 {dimension_numbers = #tpu.dot_dimension_numbers<[2], [2], [1], [1], [0, 0, 0, 1, 1, 1], [0], [0]>} : vector<2x8x8xf32>, vector<2x8x8xf32>, vector<2x8x8xf32> -> vector<2x8x8xf32>
    "tpu.trace_stop"() : () -> ()
    %cst_21 = arith.constant dense<0xFF800000> : vector<2x8xf32>
    %52 = vector.multi_reduction <maximumf>, %51, %cst_21 [2] : vector<2x8x8xf32> to vector<2x8xf32>
    %53 = vector.shape_cast %52 : vector<2x8xf32> to vector<2x8x1xf32>
    %54 = vector.broadcast %53 : vector<2x8x1xf32> to vector<2x8x8xf32>
    %55 = arith.subf %51, %54 : vector<2x8x8xf32>
    %56 = math.exp %55 : vector<2x8x8xf32>
    %cst_22 = arith.constant dense<0.000000e+00> : vector<2x8xf32>
    %57 = vector.multi_reduction <add>, %56, %cst_22 [2] : vector<2x8x8xf32> to vector<2x8xf32>
    %58 = vector.shape_cast %57 : vector<2x8xf32> to vector<2x8x1xf32>
    %59 = tpu.reciprocal %58 {approx = true} : vector<2x8x1xf32> -> vector<2x8x1xf32>
    %60 = vector.broadcast %59 : vector<2x8x1xf32> to vector<2x8x8xf32>
    %61 = arith.mulf %56, %60 : vector<2x8x8xf32>
    "tpu.trace_start"() <{level = 10 : i32, message = "bqk,bkd->bqd"}> : () -> ()
    %cst_23 = arith.constant dense<0.000000e+00> : vector<2x8x8xf32>
    %62 = tpu.matmul %61, %50, %cst_23 {dimension_numbers = #tpu.dot_dimension_numbers<[2], [1], [1], [2], [0, 0, 0, 1, 1, 2], [0], [0]>} : vector<2x8x8xf32>, vector<2x8x8xf32>, vector<2x8x8xf32> -> vector<2x8x8xf32>
    "tpu.trace_stop"() : () -> ()
    %63 = vector.extract_strided_slice %14 {offsets = [0, 0, 24], sizes = [2, 8, 8], strides = [1, 1, 1]} : vector<2x8x32xf32> to vector<2x8x8xf32>
    %64 = vector.extract_strided_slice %16 {offsets = [0, 0, 24], sizes = [2, 8, 8], strides = [1, 1, 1]} : vector<2x8x32xf32> to vector<2x8x8xf32>
    %65 = vector.extract_strided_slice %17 {offsets = [0, 0, 24], sizes = [2, 8, 8], strides = [1, 1, 1]} : vector<2x8x32xf32> to vector<2x8x8xf32>
    "tpu.trace_start"() <{level = 10 : i32, message = "bqd,bkd->bqk"}> : () -> ()
    %cst_24 = arith.constant dense<0.000000e+00> : vector<2x8x8xf32>
    %66 = tpu.matmul %63, %64, %cst_24 {dimension_numbers = #tpu.dot_dimension_numbers<[2], [2], [1], [1], [0, 0, 0, 1, 1, 1], [0], [0]>} : vector<2x8x8xf32>, vector<2x8x8xf32>, vector<2x8x8xf32> -> vector<2x8x8xf32>
    "tpu.trace_stop"() : () -> ()
    %cst_25 = arith.constant dense<0xFF800000> : vector<2x8xf32>
    %67 = vector.multi_reduction <maximumf>, %66, %cst_25 [2] : vector<2x8x8xf32> to vector<2x8xf32>
    %68 = vector.shape_cast %67 : vector<2x8xf32> to vector<2x8x1xf32>
    %69 = vector.broadcast %68 : vector<2x8x1xf32> to vector<2x8x8xf32>
    %70 = arith.subf %66, %69 : vector<2x8x8xf32>
    %71 = math.exp %70 : vector<2x8x8xf32>
    %cst_26 = arith.constant dense<0.000000e+00> : vector<2x8xf32>
    %72 = vector.multi_reduction <add>, %71, %cst_26 [2] : vector<2x8x8xf32> to vector<2x8xf32>
    %73 = vector.shape_cast %72 : vector<2x8xf32> to vector<2x8x1xf32>
    %74 = tpu.reciprocal %73 {approx = true} : vector<2x8x1xf32> -> vector<2x8x1xf32>
    %75 = vector.broadcast %74 : vector<2x8x1xf32> to vector<2x8x8xf32>
    %76 = arith.mulf %71, %75 : vector<2x8x8xf32>
    "tpu.trace_start"() <{level = 10 : i32, message = "bqk,bkd->bqd"}> : () -> ()
    %cst_27 = arith.constant dense<0.000000e+00> : vector<2x8x8xf32>
    %77 = tpu.matmul %76, %65, %cst_27 {dimension_numbers = #tpu.dot_dimension_numbers<[2], [1], [1], [2], [0, 0, 0, 1, 1, 2], [0], [0]>} : vector<2x8x8xf32>, vector<2x8x8xf32>, vector<2x8x8xf32> -> vector<2x8x8xf32>
    "tpu.trace_stop"() : () -> ()
    %78 = tpu.concatenate %32, %47, %62, %77 in 2 : vector<2x8x8xf32>, vector<2x8x8xf32>, vector<2x8x8xf32>, vector<2x8x8xf32> -> vector<2x8x32xf32>
    %79 = vector.shape_cast %78 : vector<2x8x32xf32> to vector<16x32xf32>
    %c0_28 = arith.constant 0 : index
    %c0_29 = arith.constant 0 : index
    %80 = vector.load %arg6[%c0_28, %c0_29] : memref<32x32xf32, #tpu.memory_space<vmem>>, vector<32x32xf32>
    %cst_30 = arith.constant dense<0.000000e+00> : vector<16x32xf32>
    %81 = tpu.matmul %79, %80, %cst_30 {dimension_numbers = #tpu.dot_dimension_numbers<[1], [0], [0], [1], [0, 0, 1, 1], [], []>} : vector<16x32xf32>, vector<32x32xf32>, vector<16x32xf32> -> vector<16x32xf32>
    %c0_31 = arith.constant 0 : index
    %c0_32 = arith.constant 0 : index
    %82 = vector.load %arg7[%c0_31, %c0_32] : memref<1x32xf32, #tpu.memory_space<vmem>>, vector<1x32xf32>
    %83 = vector.broadcast %82 : vector<1x32xf32> to vector<16x32xf32>
    %84 = arith.addf %81, %83 : vector<16x32xf32>
    %85 = arith.addf %0, %84 : vector<16x32xf32>
    %c0_33 = arith.constant 0 : index
    %c0_34 = arith.constant 0 : index
    %86 = vector.load %arg12[%c0_33, %c0_34] : memref<1x32xf32, #tpu.memory_space<vmem>>, vector<1x32xf32>
    %c0_35 = arith.constant 0 : index
    %c0_36 = arith.constant 0 : index
    %87 = vector.load %arg13[%c0_35, %c0_36] : memref<1x32xf32, #tpu.memory_space<vmem>>, vector<1x32xf32>
    %cst_37 = arith.constant dense<0.000000e+00> : vector<16xf32>
    %88 = vector.multi_reduction <add>, %85, %cst_37 [1] : vector<16x32xf32> to vector<16xf32>
    %89 = vector.shape_cast %88 : vector<16xf32> to vector<16x1xf32>
    %cst_38 = arith.constant 3.200000e+01 : f32
    %90 = vector.broadcast %cst_38 : f32 to vector<16x1xf32>
    %91 = arith.divf %89, %90 : vector<16x1xf32>
    %92 = vector.broadcast %91 : vector<16x1xf32> to vector<16x32xf32>
    %93 = arith.subf %85, %92 : vector<16x32xf32>
    %94 = arith.mulf %93, %93 : vector<16x32xf32>
    %cst_39 = arith.constant dense<0.000000e+00> : vector<16xf32>
    %95 = vector.multi_reduction <add>, %94, %cst_39 [1] : vector<16x32xf32> to vector<16xf32>
    %96 = vector.shape_cast %95 : vector<16xf32> to vector<16x1xf32>
    %cst_40 = arith.constant 3.200000e+01 : f32
    %97 = vector.broadcast %cst_40 : f32 to vector<16x1xf32>
    %98 = arith.divf %96, %97 : vector<16x1xf32>
    %99 = vector.broadcast %91 : vector<16x1xf32> to vector<16x32xf32>
    %100 = arith.subf %85, %99 : vector<16x32xf32>
    %cst_41 = arith.constant 9.99999974E-6 : f32
    %101 = vector.broadcast %cst_41 : f32 to vector<16x1xf32>
    %102 = arith.addf %98, %101 : vector<16x1xf32>
    %103 = math.rsqrt %102 : vector<16x1xf32>
    %104 = vector.broadcast %103 : vector<16x1xf32> to vector<16x32xf32>
    %105 = arith.mulf %100, %104 : vector<16x32xf32>
    %106 = vector.broadcast %86 : vector<1x32xf32> to vector<16x32xf32>
    %107 = arith.mulf %105, %106 : vector<16x32xf32>
    %108 = vector.broadcast %87 : vector<1x32xf32> to vector<16x32xf32>
    %109 = arith.addf %107, %108 : vector<16x32xf32>
    %c0_42 = arith.constant 0 : index
    %c0_43 = arith.constant 0 : index
    %110 = vector.load %arg8[%c0_42, %c0_43] : memref<32x64xf32, #tpu.memory_space<vmem>>, vector<32x64xf32>
    %cst_44 = arith.constant dense<0.000000e+00> : vector<16x64xf32>
    %111 = tpu.matmul %109, %110, %cst_44 {dimension_numbers = #tpu.dot_dimension_numbers<[1], [0], [0], [1], [0, 0, 1, 1], [], []>} : vector<16x32xf32>, vector<32x64xf32>, vector<16x64xf32> -> vector<16x64xf32>
    %c0_45 = arith.constant 0 : index
    %c0_46 = arith.constant 0 : index
    %112 = vector.load %arg9[%c0_45, %c0_46] : memref<1x64xf32, #tpu.memory_space<vmem>>, vector<1x64xf32>
    %113 = vector.broadcast %112 : vector<1x64xf32> to vector<16x64xf32>
    %114 = arith.addf %111, %113 : vector<16x64xf32>
    %cst_47 = arith.constant 0.000000e+00 : f32
    %115 = vector.broadcast %cst_47 : f32 to vector<16x64xf32>
    %116 = arith.maximumf %114, %115 : vector<16x64xf32>
    %c0_48 = arith.constant 0 : index
    %c0_49 = arith.constant 0 : index
    %117 = vector.load %arg10[%c0_48, %c0_49] : memref<64x32xf32, #tpu.memory_space<vmem>>, vector<64x32xf32>
    %cst_50 = arith.constant dense<0.000000e+00> : vector<16x32xf32>
    %118 = tpu.matmul %116, %117, %cst_50 {dimension_numbers = #tpu.dot_dimension_numbers<[1], [0], [0], [1], [0, 0, 1, 1], [], []>} : vector<16x64xf32>, vector<64x32xf32>, vector<16x32xf32> -> vector<16x32xf32>
    %c0_51 = arith.constant 0 : index
    %c0_52 = arith.constant 0 : index
    %119 = vector.load %arg11[%c0_51, %c0_52] : memref<1x32xf32, #tpu.memory_space<vmem>>, vector<1x32xf32>
    %120 = vector.broadcast %119 : vector<1x32xf32> to vector<16x32xf32>
    %121 = arith.addf %118, %120 : vector<16x32xf32>
    %122 = arith.addf %109, %121 : vector<16x32xf32>
    %c0_53 = arith.constant 0 : index
    %c0_54 = arith.constant 0 : index
    %123 = vector.load %arg14[%c0_53, %c0_54] : memref<1x32xf32, #tpu.memory_space<vmem>>, vector<1x32xf32>
    %c0_55 = arith.constant 0 : index
    %c0_56 = arith.constant 0 : index
    %124 = vector.load %arg15[%c0_55, %c0_56] : memref<1x32xf32, #tpu.memory_space<vmem>>, vector<1x32xf32>
    %cst_57 = arith.constant dense<0.000000e+00> : vector<16xf32>
    %125 = vector.multi_reduction <add>, %122, %cst_57 [1] : vector<16x32xf32> to vector<16xf32>
    %126 = vector.shape_cast %125 : vector<16xf32> to vector<16x1xf32>
    %cst_58 = arith.constant 3.200000e+01 : f32
    %127 = vector.broadcast %cst_58 : f32 to vector<16x1xf32>
    %128 = arith.divf %126, %127 : vector<16x1xf32>
    %129 = vector.broadcast %128 : vector<16x1xf32> to vector<16x32xf32>
    %130 = arith.subf %122, %129 : vector<16x32xf32>
    %131 = arith.mulf %130, %130 : vector<16x32xf32>
    %cst_59 = arith.constant dense<0.000000e+00> : vector<16xf32>
    %132 = vector.multi_reduction <add>, %131, %cst_59 [1] : vector<16x32xf32> to vector<16xf32>
    %133 = vector.shape_cast %132 : vector<16xf32> to vector<16x1xf32>
    %cst_60 = arith.constant 3.200000e+01 : f32
    %134 = vector.broadcast %cst_60 : f32 to vector<16x1xf32>
    %135 = arith.divf %133, %134 : vector<16x1xf32>
    %136 = vector.broadcast %128 : vector<16x1xf32> to vector<16x32xf32>
    %137 = arith.subf %122, %136 : vector<16x32xf32>
    %cst_61 = arith.constant 9.99999974E-6 : f32
    %138 = vector.broadcast %cst_61 : f32 to vector<16x1xf32>
    %139 = arith.addf %135, %138 : vector<16x1xf32>
    %140 = math.rsqrt %139 : vector<16x1xf32>
    %141 = vector.broadcast %140 : vector<16x1xf32> to vector<16x32xf32>
    %142 = arith.mulf %137, %141 : vector<16x32xf32>
    %143 = vector.broadcast %123 : vector<1x32xf32> to vector<16x32xf32>
    %144 = arith.mulf %142, %143 : vector<16x32xf32>
    %145 = vector.broadcast %124 : vector<1x32xf32> to vector<16x32xf32>
    %146 = arith.addf %144, %145 : vector<16x32xf32>
    %c0_62 = arith.constant 0 : index
    %c0_63 = arith.constant 0 : index
    %147 = vector.load %arg16[%c0_62, %c0_63] : memref<16x32xf32, #tpu.memory_space<vmem>>, vector<16x32xf32>
    tpu.vector_store %arg16[%c0_62, %c0_63], %146 {strides = array<i32>} : memref<16x32xf32, #tpu.memory_space<vmem>>, vector<16x32xf32>,
    return
  }
}

</mosaic_0001>

<llo_original>
// kernel: transformer_encoder_layer.1
$region0: #{transformer_encoder_layer.1}
  #allocation0 [shape = 'u32[]', space=smem, size = 0x4, offset = 0x4, fixed_abs, tag = 'smem constant byte address 0x4 - core index']
  #allocation1 [shape = 'u32[72,128]{1,0:T(1,128)}', space=vmem, size = 0x9000, scoped, tag = 'internal scratch']
  %s0 = inlined_call_operand.vmem [shape: f32[16,32], index: 0, kind: input, shape index: {}]
  %s1 = inlined_call_operand.vmem [shape: f32[16,32], index: 1, kind: input, shape index: {}]
  %s2 = inlined_call_operand.vmem [shape: f32[32,64], index: 2, kind: input, shape index: {}]
  %s3 = inlined_call_operand.vmem [shape: f32[1,64], index: 3, kind: input, shape index: {}]
  %s4 = inlined_call_operand.vmem [shape: f32[32,32], index: 4, kind: input, shape index: {}]
  %s5 = inlined_call_operand.vmem [shape: f32[1,32], index: 5, kind: input, shape index: {}]
  %s6 = inlined_call_operand.vmem [shape: f32[32,32], index: 6, kind: input, shape index: {}]
  %s7 = inlined_call_operand.vmem [shape: f32[1,32], index: 7, kind: input, shape index: {}]
  %s8 = inlined_call_operand.vmem [shape: f32[32,64], index: 8, kind: input, shape index: {}]
  %s9 = inlined_call_operand.vmem [shape: f32[1,64], index: 9, kind: input, shape index: {}]
  %s10 = inlined_call_operand.vmem [shape: f32[64,32], index: 10, kind: input, shape index: {}]
  %s11 = inlined_call_operand.vmem [shape: f32[1,32], index: 11, kind: input, shape index: {}]
  %s12 = inlined_call_operand.vmem [shape: f32[1,32], index: 12, kind: input, shape index: {}]
  %s13 = inlined_call_operand.vmem [shape: f32[1,32], index: 13, kind: input, shape index: {}]
  %s14 = inlined_call_operand.vmem [shape: f32[1,32], index: 14, kind: input, shape index: {}]
  %s15 = inlined_call_operand.vmem [shape: f32[1,32], index: 15, kind: input, shape index: {}]
  %s16 = inlined_call_operand.vmem [shape: f32[16,32], index: 16, kind: output, shape index: {}]
  %s17 = sld [smem:[#allocation0]]
  $region74: #{transformer_encoder_layer.1} parent=0
    _
  %s19 = ssub.s32 1, %s17
  %s20 = scalar_select 0, %s19, %s17
  // Predicated region
  $region2: #{transformer_encoder_layer.1} parent=0 // pred_check
    _
  $region3: #{transformer_encoder_layer.1} parent=0 // pred_check_branch
    %22 = sbr.rel (0) target = $region5
  $region4: #{transformer_encoder_layer.1} parent=0 // pred_region
    _
  $region5: #{transformer_encoder_layer.1} parent=0 // pred_fallthru
    _
  // Predicated region
  $region6: #{transformer_encoder_layer.1} parent=0 // pred_check
    _
  $region7: #{transformer_encoder_layer.1} parent=0 // pred_check_branch
    %24 = sbr.rel (0) target = $region9
  $region8: #{transformer_encoder_layer.1} parent=0 // pred_region
    _
  $region9: #{transformer_encoder_layer.1} parent=0 // pred_fallthru
    _
  // Predicated region
  $region10: #{transformer_encoder_layer.1} parent=0 // pred_check
    _
  $region11: #{transformer_encoder_layer.1} parent=0 // pred_check_branch
    %26 = sbr.rel (0) target = $region13
  $region12: #{transformer_encoder_layer.1} parent=0 // pred_region
    _
  $region13: #{transformer_encoder_layer.1} parent=0 // pred_fallthru
    _
  // Predicated region
  $region14: #{transformer_encoder_layer.1} parent=0 // pred_check
    _
  $region15: #{transformer_encoder_layer.1} parent=0 // pred_check_branch
    %28 = sbr.rel (0) target = $region17
  $region16: #{transformer_encoder_layer.1} parent=0 // pred_region
    _
  $region17: #{transformer_encoder_layer.1} parent=0 // pred_fallthru
    _
  // Predicated region
  $region18: #{transformer_encoder_layer.1} parent=0 // pred_check
    _
  $region19: #{transformer_encoder_layer.1} parent=0 // pred_check_branch
    %30 = sbr.rel (0) target = $region21
  $region20: #{transformer_encoder_layer.1} parent=0 // pred_region
    _
  $region21: #{transformer_encoder_layer.1} parent=0 // pred_fallthru
    _
  // Predicated region
  $region22: #{transformer_encoder_layer.1} parent=0 // pred_check
    _
  $region23: #{transformer_encoder_layer.1} parent=0 // pred_check_branch
    %32 = sbr.rel (0) target = $region25
  $region24: #{transformer_encoder_layer.1} parent=0 // pred_region
    _
  $region25: #{transformer_encoder_layer.1} parent=0 // pred_fallthru
    _
  // Predicated region
  $region26: #{transformer_encoder_layer.1} parent=0 // pred_check
    _
  $region27: #{transformer_encoder_layer.1} parent=0 // pred_check_branch
    %34 = sbr.rel (0) target = $region29
  $region28: #{transformer_encoder_layer.1} parent=0 // pred_region
    _
  $region29: #{transformer_encoder_layer.1} parent=0 // pred_fallthru
    _
  // Predicated region
  $region30: #{transformer_encoder_layer.1} parent=0 // pred_check
    _
  $region31: #{transformer_encoder_layer.1} parent=0 // pred_check_branch
    %36 = sbr.rel (0) target = $region33
  $region32: #{transformer_encoder_layer.1} parent=0 // pred_region
    _
  $region33: #{transformer_encoder_layer.1} parent=0 // pred_fallthru
    _
  // Predicated region
  $region34: #{transformer_encoder_layer.1} parent=0 // pred_check
    _
  $region35: #{transformer_encoder_layer.1} parent=0 // pred_check_branch
    %38 = sbr.rel (0) target = $region37
  $region36: #{transformer_encoder_layer.1} parent=0 // pred_region
    _
  $region37: #{transformer_encoder_layer.1} parent=0 // pred_fallthru
    _
  // Predicated region
  $region38: #{transformer_encoder_layer.1} parent=0 // pred_check
    _
  $region39: #{transformer_encoder_layer.1} parent=0 // pred_check_branch
    %40 = sbr.rel (0) target = $region41
  $region40: #{transformer_encoder_layer.1} parent=0 // pred_region
    _
  $region41: #{transformer_encoder_layer.1} parent=0 // pred_fallthru
    _
  // Predicated region
  $region42: #{transformer_encoder_layer.1} parent=0 // pred_check
    _
  $region43: #{transformer_encoder_layer.1} parent=0 // pred_check_branch
    %42 = sbr.rel (0) target = $region45
  $region44: #{transformer_encoder_layer.1} parent=0 // pred_region
    _
  $region45: #{transformer_encoder_layer.1} parent=0 // pred_fallthru
    _
  // Predicated region
  $region46: #{transformer_encoder_layer.1} parent=0 // pred_check
    _
  $region47: #{transformer_encoder_layer.1} parent=0 // pred_check_branch
    %44 = sbr.rel (0) target = $region49
  $region48: #{transformer_encoder_layer.1} parent=0 // pred_region
    _
  $region49: #{transformer_encoder_layer.1} parent=0 // pred_fallthru
    _
  // Predicated region
  $region50: #{transformer_encoder_layer.1} parent=0 // pred_check
    _
  $region51: #{transformer_encoder_layer.1} parent=0 // pred_check_branch
    %46 = sbr.rel (0) target = $region53
  $region52: #{transformer_encoder_layer.1} parent=0 // pred_region
    _
  $region53: #{transformer_encoder_layer.1} parent=0 // pred_fallthru
    _
  // Predicated region
  $region54: #{transformer_encoder_layer.1} parent=0 // pred_check
    _
  $region55: #{transformer_encoder_layer.1} parent=0 // pred_check_branch
    %48 = sbr.rel (0) target = $region57
  $region56: #{transformer_encoder_layer.1} parent=0 // pred_region
    _
  $region57: #{transformer_encoder_layer.1} parent=0 // pred_fallthru
    _
  // Predicated region
  $region58: #{transformer_encoder_layer.1} parent=0 // pred_check
    _
  $region59: #{transformer_encoder_layer.1} parent=0 // pred_check_branch
    %50 = sbr.rel (0) target = $region61
  $region60: #{transformer_encoder_layer.1} parent=0 // pred_region
    _
  $region61: #{transformer_encoder_layer.1} parent=0 // pred_fallthru
    _
  // Predicated region
  $region62: #{transformer_encoder_layer.1} parent=0 // pred_check
    _
  $region63: #{transformer_encoder_layer.1} parent=0 // pred_check_branch
    %52 = sbr.rel (0) target = $region65
  $region64: #{transformer_encoder_layer.1} parent=0 // pred_region
    _
  $region65: #{transformer_encoder_layer.1} parent=0 // pred_fallthru
    _
  %v53 = vld [vmem:[%s0] sm:$0xff]
  %v54 = vld [vmem:[%s0 + $0x8] sm:$0xff]
  %v55 = vld [vmem:[%s1] sm:$0xff]
  %v56 = vld [vmem:[%s1 + $0x8] sm:$0xff]
  %v57 = vadd.f32 %v53, %v55
  %v58 = vadd.f32 %v54, %v56
  %v59 = vld [vmem:[%s2] sm:$0xff]
  %v60 = vld [vmem:[%s2 + $0x8] sm:$0xff]
  %v61 = vld [vmem:[%s2 + $0x10] sm:$0xff]
  %v62 = vld [vmem:[%s2 + $0x18] sm:$0xff]
  %v63 = vld [vmem:[%s3] sm:$0x1]
  %v65 = vperm.slane %v63, 0
  %vm67 = vcmask 261120
  %v69 = vsel %vm67, %v57, 0
  %v72 = vsel %vm67, %v58, 0
  %74 = vmatpush.msra.mxu0 0.0
  %75 = vmatpush.msra.mxu0 0.0
  %76 = vmatpush.msra.mxu0 0.0
  %77 = vmatpush.msra.mxu0 0.0
  %78 = vmatpush.msra.mxu0 0.0
  %79 = vmatpush.msra.mxu0 0.0
  %80 = vmatpush.msra.mxu0 0.0
  %81 = vmatpush.msra.mxu0 0.0
  %82 = vmatpush.msra.mxu0 0.0
  %83 = vmatpush.msra.mxu0 0.0
  %84 = vmatpush.msra.mxu0 0.0
  %85 = vmatpush.msra.mxu0 0.0
  %86 = vmatpush.msra.mxu0 %v62
  %87 = vmatpush.msra.mxu0 %v61
  %88 = vmatpush.msra.mxu0 %v60
  %89 = vmatpush.msra.mxu0 %v59
  %90 = vmatmul.f32.gmra.mxu0 %v69
  %v91 = vpop.f32.mrf.mxu0
  %v92 = vadd.f32 %v65, %v91
  %93 = vmatmul.f32.gmra.mxu0 %v72
  %v94 = vpop.f32.mrf.mxu0
  %v95 = vadd.f32 %v65, %v94
  %96 = vdwg.mxu0
  %v97 = vld [vmem:[%s4] sm:$0xff]
  %v98 = vld [vmem:[%s4 + $0x8] sm:$0xff]
  %v99 = vld [vmem:[%s4 + $0x10] sm:$0xff]
  %v100 = vld [vmem:[%s4 + $0x18] sm:$0xff]
  %v101 = vld [vmem:[%s5] sm:$0x1]
  %v103 = vperm.slane %v101, 0
  %v106 = vsel %vm67, %v53, 0
  %v109 = vsel %vm67, %v54, 0
  %111 = vmatpush.msra.mxu0 0.0
  %112 = vmatpush.msra.mxu0 0.0
  %113 = vmatpush.msra.mxu0 0.0
  %114 = vmatpush.msra.mxu0 0.0
  %115 = vmatpush.msra.mxu0 0.0
  %116 = vmatpush.msra.mxu0 0.0
  %117 = vmatpush.msra.mxu0 0.0
  %118 = vmatpush.msra.mxu0 0.0
  %119 = vmatpush.msra.mxu0 0.0
  %120 = vmatpush.msra.mxu0 0.0
  %121 = vmatpush.msra.mxu0 0.0
  %122 = vmatpush.msra.mxu0 0.0
  %123 = vmatpush.msra.mxu0 %v100
  %124 = vmatpush.msra.mxu0 %v99
  %125 = vmatpush.msra.mxu0 %v98
  %126 = vmatpush.msra.mxu0 %v97
  %127 = vmatmul.f32.gmra.mxu0 %v106
  %v128 = vpop.f32.mrf.mxu0
  %v129 = vadd.f32 %v103, %v128
  %130 = vmatmul.f32.gmra.mxu0 %v109
  %v131 = vpop.f32.mrf.mxu0
  %v132 = vadd.f32 %v103, %v131
  %133 = vdwg.mxu0
  %135 = vrot.lane.b32.xlu0 %v92, 96
  %v136 = vpop.permute.xlu0 %135
  %vm137 = vcmask 64512
  %v138 = vsel %vm137, %v92, 0
  %v140 = vsel %vm137, %v136, 0
  %142 = vmatpush.xpose.msra.mxu0 0.0
  %143 = vmatpush.xpose.msra.mxu0 0.0
  %144 = vmatpush.xpose.msra.mxu0 0.0
  %145 = vmatpush.xpose.msra.mxu0 0.0
  %146 = vmatpush.xpose.msra.mxu0 0.0
  %147 = vmatpush.xpose.msra.mxu0 0.0
  %148 = vmatpush.xpose.msra.mxu0 0.0
  %149 = vmatpush.xpose.msra.mxu0 0.0
  %150 = vmatpush.xpose.msra.mxu0 0.0
  %151 = vmatpush.xpose.msra.mxu0 0.0
  %152 = vmatpush.xpose.msra.mxu0 0.0
  %153 = vmatpush.xpose.msra.mxu0 0.0
  %154 = vmatpush.xpose.msra.mxu0 0.0
  %155 = vmatpush.xpose.msra.mxu0 0.0
  %156 = vmatpush.xpose.msra.mxu0 0.0
  %157 = vmatpush.xpose.msra.mxu0 %v140
  %158 = vmatmul.f32.gmra.mxu0 %v138
  %v159 = vpop.f32.mrf.mxu0
  %v160 = vadd.f32 0.0, %v159
  %161 = vdwg.mxu0
  %163 = vrot.lane.b32.xlu0 %v95, 96
  %v164 = vpop.permute.xlu0 %163
  %v165 = vsel %vm137, %v95, 0
  %v167 = vsel %vm137, %v164, 0
  %169 = vmatpush.xpose.msra.mxu0 0.0
  %170 = vmatpush.xpose.msra.mxu0 0.0
  %171 = vmatpush.xpose.msra.mxu0 0.0
  %172 = vmatpush.xpose.msra.mxu0 0.0
  %173 = vmatpush.xpose.msra.mxu0 0.0
  %174 = vmatpush.xpose.msra.mxu0 0.0
  %175 = vmatpush.xpose.msra.mxu0 0.0
  %176 = vmatpush.xpose.msra.mxu0 0.0
  %177 = vmatpush.xpose.msra.mxu0 0.0
  %178 = vmatpush.xpose.msra.mxu0 0.0
  %179 = vmatpush.xpose.msra.mxu0 0.0
  %180 = vmatpush.xpose.msra.mxu0 0.0
  %181 = vmatpush.xpose.msra.mxu0 0.0
  %182 = vmatpush.xpose.msra.mxu0 0.0
  %183 = vmatpush.xpose.msra.mxu0 0.0
  %184 = vmatpush.xpose.msra.mxu0 %v167
  %185 = vmatmul.f32.gmra.mxu0 %v165
  %v186 = vpop.f32.mrf.mxu0
  %v187 = vadd.f32 0.0, %v186
  %188 = vdwg.mxu0
  %v189 = vsel %vm137, %v160, -inf
  %190 = vmax.xlane.f32.xlu0 %v189
  %v191 = vpop.xlane.xlu0 %190
  %v192 = vsel %vm137, %v187, -inf
  %193 = vmax.xlane.f32.xlu0 %v192
  %v194 = vpop.xlane.xlu0 %193
  %v195 = vsub.f32 %v160, %v191
  %v196 = vsub.f32 %v187, %v194
  %v197 = vmul.f32 %v195, 1.442695
  %v198 = vpow.pop %v197
  %v199 = vmul.f32 %v196, 1.442695
  %v200 = vpow.pop %v199
  %v201 = vsel %vm137, %v198, 0.0
  %202 = vadd.xlane.f32.xlu0 %v201
  %v203 = vpop.xlane.xlu0 %202
  %v204 = vsel %vm137, %v200, 0.0
  %205 = vadd.xlane.f32.xlu0 %v204
  %v206 = vpop.xlane.xlu0 %205
  %v207 = vrcp.pop %v203
  %v208 = vrcp.pop %v206
  %v209 = vmul.f32 %v198, %v207
  %v210 = vmul.f32 %v200, %v208
  %v212 = vsel %vm137, %v209, 0
  %214 = vmatpush.msra.mxu0 0.0
  %215 = vmatpush.msra.mxu0 0.0
  %216 = vmatpush.msra.mxu0 0.0
  %217 = vmatpush.msra.mxu0 0.0
  %218 = vmatpush.msra.mxu0 0.0
  %219 = vmatpush.msra.mxu0 0.0
  %220 = vmatpush.msra.mxu0 0.0
  %221 = vmatpush.msra.mxu0 0.0
  %222 = vmatpush.msra.mxu0 0.0
  %223 = vmatpush.msra.mxu0 0.0
  %224 = vmatpush.msra.mxu0 0.0
  %225 = vmatpush.msra.mxu0 0.0
  %226 = vmatpush.msra.mxu0 0.0
  %227 = vmatpush.msra.mxu0 0.0
  %228 = vmatpush.msra.mxu0 0.0
  %229 = vmatpush.msra.mxu0 %v129
  %230 = vmatmul.f32.gmra.mxu0 %v212
  %v231 = vpop.f32.mrf.mxu0
  %v232 = vadd.f32 0.0, %v231
  %233 = vdwg.mxu0
  %v235 = vsel %vm137, %v210, 0
  %237 = vmatpush.msra.mxu0 0.0
  %238 = vmatpush.msra.mxu0 0.0
  %239 = vmatpush.msra.mxu0 0.0
  %240 = vmatpush.msra.mxu0 0.0
  %241 = vmatpush.msra.mxu0 0.0
  %242 = vmatpush.msra.mxu0 0.0
  %243 = vmatpush.msra.mxu0 0.0
  %244 = vmatpush.msra.mxu0 0.0
  %245 = vmatpush.msra.mxu0 0.0
  %246 = vmatpush.msra.mxu0 0.0
  %247 = vmatpush.msra.mxu0 0.0
  %248 = vmatpush.msra.mxu0 0.0
  %249 = vmatpush.msra.mxu0 0.0
  %250 = vmatpush.msra.mxu0 0.0
  %251 = vmatpush.msra.mxu0 0.0
  %252 = vmatpush.msra.mxu0 %v132
  %253 = vmatmul.f32.gmra.mxu0 %v235
  %v254 = vpop.f32.mrf.mxu0
  %v255 = vadd.f32 0.0, %v254
  %256 = vdwg.mxu0
  %257 = vrot.lane.b32.xlu0 %v92, 120
  %v258 = vpop.permute.xlu0 %257
  %259 = vrot.lane.b32.xlu0 %v92, 88
  %v260 = vpop.permute.xlu0 %259
  %v261 = vsel %vm137, %v258, 0
  %v263 = vsel %vm137, %v260, 0
  %265 = vmatpush.xpose.msra.mxu0 0.0
  %266 = vmatpush.xpose.msra.mxu0 0.0
  %267 = vmatpush.xpose.msra.mxu0 0.0
  %268 = vmatpush.xpose.msra.mxu0 0.0
  %269 = vmatpush.xpose.msra.mxu0 0.0
  %270 = vmatpush.xpose.msra.mxu0 0.0
  %271 = vmatpush.xpose.msra.mxu0 0.0
  %272 = vmatpush.xpose.msra.mxu0 0.0
  %273 = vmatpush.xpose.msra.mxu0 0.0
  %274 = vmatpush.xpose.msra.mxu0 0.0
  %275 = vmatpush.xpose.msra.mxu0 0.0
  %276 = vmatpush.xpose.msra.mxu0 0.0
  %277 = vmatpush.xpose.msra.mxu0 0.0
  %278 = vmatpush.xpose.msra.mxu0 0.0
  %279 = vmatpush.xpose.msra.mxu0 0.0
  %280 = vmatpush.xpose.msra.mxu0 %v263
  %281 = vmatmul.f32.gmra.mxu0 %v261
  %v282 = vpop.f32.mrf.mxu0
  %v283 = vadd.f32 0.0, %v282
  %284 = vdwg.mxu0
  %285 = vrot.lane.b32.xlu0 %v95, 120
  %v286 = vpop.permute.xlu0 %285
  %287 = vrot.lane.b32.xlu0 %v95, 88
  %v288 = vpop.permute.xlu0 %287
  %v289 = vsel %vm137, %v286, 0
  %v291 = vsel %vm137, %v288, 0
  %293 = vmatpush.xpose.msra.mxu0 0.0
  %294 = vmatpush.xpose.msra.mxu0 0.0
  %295 = vmatpush.xpose.msra.mxu0 0.0
  %296 = vmatpush.xpose.msra.mxu0 0.0
  %297 = vmatpush.xpose.msra.mxu0 0.0
  %298 = vmatpush.xpose.msra.mxu0 0.0
  %299 = vmatpush.xpose.msra.mxu0 0.0
  %300 = vmatpush.xpose.msra.mxu0 0.0
  %301 = vmatpush.xpose.msra.mxu0 0.0
  %302 = vmatpush.xpose.msra.mxu0 0.0
  %303 = vmatpush.xpose.msra.mxu0 0.0
  %304 = vmatpush.xpose.msra.mxu0 0.0
  %305 = vmatpush.xpose.msra.mxu0 0.0
  %306 = vmatpush.xpose.msra.mxu0 0.0
  %307 = vmatpush.xpose.msra.mxu0 0.0
  %308 = vmatpush.xpose.msra.mxu0 %v291
  %309 = vmatmul.f32.gmra.mxu0 %v289
  %v310 = vpop.f32.mrf.mxu0
  %v311 = vadd.f32 0.0, %v310
  %312 = vdwg.mxu0
  %v313 = vsel %vm137, %v283, -inf
  %314 = vmax.xlane.f32.xlu0 %v313
  %v315 = vpop.xlane.xlu0 %314
  %v316 = vsel %vm137, %v311, -inf
  %317 = vmax.xlane.f32.xlu0 %v316
  %v318 = vpop.xlane.xlu0 %317
  %v319 = vsub.f32 %v283, %v315
  %v320 = vsub.f32 %v311, %v318
  %v321 = vmul.f32 %v319, 1.442695
  %v322 = vpow.pop %v321
  %v323 = vmul.f32 %v320, 1.442695
  %v324 = vpow.pop %v323
  %v325 = vsel %vm137, %v322, 0.0
  %326 = vadd.xlane.f32.xlu0 %v325
  %v327 = vpop.xlane.xlu0 %326
  %v328 = vsel %vm137, %v324, 0.0
  %329 = vadd.xlane.f32.xlu0 %v328
  %v330 = vpop.xlane.xlu0 %329
  %v331 = vrcp.pop %v327
  %v332 = vrcp.pop %v330
  %v333 = vmul.f32 %v322, %v331
  %v334 = vmul.f32 %v324, %v332
  %336 = vrot.lane.b32.xlu0 %v129, 120
  %v337 = vpop.permute.xlu0 %336
  %v340 = vsel %vm137, %v333, 0
  %342 = vmatpush.msra.mxu0 0.0
  %343 = vmatpush.msra.mxu0 0.0
  %344 = vmatpush.msra.mxu0 0.0
  %345 = vmatpush.msra.mxu0 0.0
  %346 = vmatpush.msra.mxu0 0.0
  %347 = vmatpush.msra.mxu0 0.0
  %348 = vmatpush.msra.mxu0 0.0
  %349 = vmatpush.msra.mxu0 0.0
  %350 = vmatpush.msra.mxu0 0.0
  %351 = vmatpush.msra.mxu0 0.0
  %352 = vmatpush.msra.mxu0 0.0
  %353 = vmatpush.msra.mxu0 0.0
  %354 = vmatpush.msra.mxu0 0.0
  %355 = vmatpush.msra.mxu0 0.0
  %356 = vmatpush.msra.mxu0 0.0
  %357 = vmatpush.msra.mxu0 %v337
  %358 = vmatmul.f32.gmra.mxu0 %v340
  %v359 = vpop.f32.mrf.mxu0
  %v360 = vadd.f32 0.0, %v359
  %361 = vdwg.mxu0
  %363 = vrot.lane.b32.xlu0 %v132, 120
  %v364 = vpop.permute.xlu0 %363
  %v367 = vsel %vm137, %v334, 0
  %369 = vmatpush.msra.mxu0 0.0
  %370 = vmatpush.msra.mxu0 0.0
  %371 = vmatpush.msra.mxu0 0.0
  %372 = vmatpush.msra.mxu0 0.0
  %373 = vmatpush.msra.mxu0 0.0
  %374 = vmatpush.msra.mxu0 0.0
  %375 = vmatpush.msra.mxu0 0.0
  %376 = vmatpush.msra.mxu0 0.0
  %377 = vmatpush.msra.mxu0 0.0
  %378 = vmatpush.msra.mxu0 0.0
  %379 = vmatpush.msra.mxu0 0.0
  %380 = vmatpush.msra.mxu0 0.0
  %381 = vmatpush.msra.mxu0 0.0
  %382 = vmatpush.msra.mxu0 0.0
  %383 = vmatpush.msra.mxu0 0.0
  %384 = vmatpush.msra.mxu0 %v364
  %385 = vmatmul.f32.gmra.mxu0 %v367
  %v386 = vpop.f32.mrf.mxu0
  %v387 = vadd.f32 0.0, %v386
  %388 = vdwg.mxu0
  %389 = vrot.lane.b32.xlu0 %v92, 112
  %v390 = vpop.permute.xlu0 %389
  %391 = vrot.lane.b32.xlu0 %v92, 80
  %v392 = vpop.permute.xlu0 %391
  %v393 = vsel %vm137, %v390, 0
  %v395 = vsel %vm137, %v392, 0
  %397 = vmatpush.xpose.msra.mxu0 0.0
  %398 = vmatpush.xpose.msra.mxu0 0.0
  %399 = vmatpush.xpose.msra.mxu0 0.0
  %400 = vmatpush.xpose.msra.mxu0 0.0
  %401 = vmatpush.xpose.msra.mxu0 0.0
  %402 = vmatpush.xpose.msra.mxu0 0.0
  %403 = vmatpush.xpose.msra.mxu0 0.0
  %404 = vmatpush.xpose.msra.mxu0 0.0
  %405 = vmatpush.xpose.msra.mxu0 0.0
  %406 = vmatpush.xpose.msra.mxu0 0.0
  %407 = vmatpush.xpose.msra.mxu0 0.0
  %408 = vmatpush.xpose.msra.mxu0 0.0
  %409 = vmatpush.xpose.msra.mxu0 0.0
  %410 = vmatpush.xpose.msra.mxu0 0.0
  %411 = vmatpush.xpose.msra.mxu0 0.0
  %412 = vmatpush.xpose.msra.mxu0 %v395
  %413 = vmatmul.f32.gmra.mxu0 %v393
  %v414 = vpop.f32.mrf.mxu0
  %v415 = vadd.f32 0.0, %v414
  %416 = vdwg.mxu0
  %417 = vrot.lane.b32.xlu0 %v95, 112
  %v418 = vpop.permute.xlu0 %417
  %419 = vrot.lane.b32.xlu0 %v95, 80
  %v420 = vpop.permute.xlu0 %419
  %v421 = vsel %vm137, %v418, 0
  %v423 = vsel %vm137, %v420, 0
  %425 = vmatpush.xpose.msra.mxu0 0.0
  %426 = vmatpush.xpose.msra.mxu0 0.0
  %427 = vmatpush.xpose.msra.mxu0 0.0
  %428 = vmatpush.xpose.msra.mxu0 0.0
  %429 = vmatpush.xpose.msra.mxu0 0.0
  %430 = vmatpush.xpose.msra.mxu0 0.0
  %431 = vmatpush.xpose.msra.mxu0 0.0
  %432 = vmatpush.xpose.msra.mxu0 0.0
  %433 = vmatpush.xpose.msra.mxu0 0.0
  %434 = vmatpush.xpose.msra.mxu0 0.0
  %435 = vmatpush.xpose.msra.mxu0 0.0
  %436 = vmatpush.xpose.msra.mxu0 0.0
  %437 = vmatpush.xpose.msra.mxu0 0.0
  %438 = vmatpush.xpose.msra.mxu0 0.0
  %439 = vmatpush.xpose.msra.mxu0 0.0
  %440 = vmatpush.xpose.msra.mxu0 %v423
  %441 = vmatmul.f32.gmra.mxu0 %v421
  %v442 = vpop.f32.mrf.mxu0
  %v443 = vadd.f32 0.0, %v442
  %444 = vdwg.mxu0
  %v445 = vsel %vm137, %v415, -inf
  %446 = vmax.xlane.f32.xlu0 %v445
  %v447 = vpop.xlane.xlu0 %446
  %v448 = vsel %vm137, %v443, -inf
  %449 = vmax.xlane.f32.xlu0 %v448
  %v450 = vpop.xlane.xlu0 %449
  %v451 = vsub.f32 %v415, %v447
  %v452 = vsub.f32 %v443, %v450
  %v453 = vmul.f32 %v451, 1.442695
  %v454 = vpow.pop %v453
  %v455 = vmul.f32 %v452, 1.442695
  %v456 = vpow.pop %v455
  %v457 = vsel %vm137, %v454, 0.0
  %458 = vadd.xlane.f32.xlu0 %v457
  %v459 = vpop.xlane.xlu0 %458
  %v460 = vsel %vm137, %v456, 0.0
  %461 = vadd.xlane.f32.xlu0 %v460
  %v462 = vpop.xlane.xlu0 %461
  %v463 = vrcp.pop %v459
  %v464 = vrcp.pop %v462
  %v465 = vmul.f32 %v454, %v463
  %v466 = vmul.f32 %v456, %v464
  %467 = vrot.lane.b32.xlu0 %v129, 112
  %v468 = vpop.permute.xlu0 %467
  %v471 = vsel %vm137, %v465, 0
  %473 = vmatpush.msra.mxu0 0.0
  %474 = vmatpush.msra.mxu0 0.0
  %475 = vmatpush.msra.mxu0 0.0
  %476 = vmatpush.msra.mxu0 0.0
  %477 = vmatpush.msra.mxu0 0.0
  %478 = vmatpush.msra.mxu0 0.0
  %479 = vmatpush.msra.mxu0 0.0
  %480 = vmatpush.msra.mxu0 0.0
  %481 = vmatpush.msra.mxu0 0.0
  %482 = vmatpush.msra.mxu0 0.0
  %483 = vmatpush.msra.mxu0 0.0
  %484 = vmatpush.msra.mxu0 0.0
  %485 = vmatpush.msra.mxu0 0.0
  %486 = vmatpush.msra.mxu0 0.0
  %487 = vmatpush.msra.mxu0 0.0
  %488 = vmatpush.msra.mxu0 %v468
  %489 = vmatmul.f32.gmra.mxu0 %v471
  %v490 = vpop.f32.mrf.mxu0
  %v491 = vadd.f32 0.0, %v490
  %492 = vdwg.mxu0
  %493 = vrot.lane.b32.xlu0 %v132, 112
  %v494 = vpop.permute.xlu0 %493
  %v497 = vsel %vm137, %v466, 0
  %499 = vmatpush.msra.mxu0 0.0
  %500 = vmatpush.msra.mxu0 0.0
  %501 = vmatpush.msra.mxu0 0.0
  %502 = vmatpush.msra.mxu0 0.0
  %503 = vmatpush.msra.mxu0 0.0
  %504 = vmatpush.msra.mxu0 0.0
  %505 = vmatpush.msra.mxu0 0.0
  %506 = vmatpush.msra.mxu0 0.0
  %507 = vmatpush.msra.mxu0 0.0
  %508 = vmatpush.msra.mxu0 0.0
  %509 = vmatpush.msra.mxu0 0.0
  %510 = vmatpush.msra.mxu0 0.0
  %511 = vmatpush.msra.mxu0 0.0
  %512 = vmatpush.msra.mxu0 0.0
  %513 = vmatpush.msra.mxu0 0.0
  %514 = vmatpush.msra.mxu0 %v494
  %515 = vmatmul.f32.gmra.mxu0 %v497
  %v516 = vpop.f32.mrf.mxu0
  %v517 = vadd.f32 0.0, %v516
  %518 = vdwg.mxu0
  %519 = vrot.lane.b32.xlu0 %v92, 104
  %v520 = vpop.permute.xlu0 %519
  %521 = vrot.lane.b32.xlu0 %v92, 72
  %v522 = vpop.permute.xlu0 %521
  %v523 = vsel %vm137, %v520, 0
  %v525 = vsel %vm137, %v522, 0
  %527 = vmatpush.xpose.msra.mxu0 0.0
  %528 = vmatpush.xpose.msra.mxu0 0.0
  %529 = vmatpush.xpose.msra.mxu0 0.0
  %530 = vmatpush.xpose.msra.mxu0 0.0
  %531 = vmatpush.xpose.msra.mxu0 0.0
  %532 = vmatpush.xpose.msra.mxu0 0.0
  %533 = vmatpush.xpose.msra.mxu0 0.0
  %534 = vmatpush.xpose.msra.mxu0 0.0
  %535 = vmatpush.xpose.msra.mxu0 0.0
  %536 = vmatpush.xpose.msra.mxu0 0.0
  %537 = vmatpush.xpose.msra.mxu0 0.0
  %538 = vmatpush.xpose.msra.mxu0 0.0
  %539 = vmatpush.xpose.msra.mxu0 0.0
  %540 = vmatpush.xpose.msra.mxu0 0.0
  %541 = vmatpush.xpose.msra.mxu0 0.0
  %542 = vmatpush.xpose.msra.mxu0 %v525
  %543 = vmatmul.f32.gmra.mxu0 %v523
  %v544 = vpop.f32.mrf.mxu0
  %v545 = vadd.f32 0.0, %v544
  %546 = vdwg.mxu0
  %547 = vrot.lane.b32.xlu0 %v95, 104
  %v548 = vpop.permute.xlu0 %547
  %549 = vrot.lane.b32.xlu0 %v95, 72
  %v550 = vpop.permute.xlu0 %549
  %v551 = vsel %vm137, %v548, 0
  %v553 = vsel %vm137, %v550, 0
  %555 = vmatpush.xpose.msra.mxu0 0.0
  %556 = vmatpush.xpose.msra.mxu0 0.0
  %557 = vmatpush.xpose.msra.mxu0 0.0
  %558 = vmatpush.xpose.msra.mxu0 0.0
  %559 = vmatpush.xpose.msra.mxu0 0.0
  %560 = vmatpush.xpose.msra.mxu0 0.0
  %561 = vmatpush.xpose.msra.mxu0 0.0
  %562 = vmatpush.xpose.msra.mxu0 0.0
  %563 = vmatpush.xpose.msra.mxu0 0.0
  %564 = vmatpush.xpose.msra.mxu0 0.0
  %565 = vmatpush.xpose.msra.mxu0 0.0
  %566 = vmatpush.xpose.msra.mxu0 0.0
  %567 = vmatpush.xpose.msra.mxu0 0.0
  %568 = vmatpush.xpose.msra.mxu0 0.0
  %569 = vmatpush.xpose.msra.mxu0 0.0
  %570 = vmatpush.xpose.msra.mxu0 %v553
  %571 = vmatmul.f32.gmra.mxu0 %v551
  %v572 = vpop.f32.mrf.mxu0
  %v573 = vadd.f32 0.0, %v572
  %574 = vdwg.mxu0
  %v575 = vsel %vm137, %v545, -inf
  %576 = vmax.xlane.f32.xlu0 %v575
  %v577 = vpop.xlane.xlu0 %576
  %v578 = vsel %vm137, %v573, -inf
  %579 = vmax.xlane.f32.xlu0 %v578
  %v580 = vpop.xlane.xlu0 %579
  %v581 = vsub.f32 %v545, %v577
  %v582 = vsub.f32 %v573, %v580
  %v583 = vmul.f32 %v581, 1.442695
  %v584 = vpow.pop %v583
  %v585 = vmul.f32 %v582, 1.442695
  %v586 = vpow.pop %v585
  %v587 = vsel %vm137, %v584, 0.0
  %588 = vadd.xlane.f32.xlu0 %v587
  %v589 = vpop.xlane.xlu0 %588
  %v590 = vsel %vm137, %v586, 0.0
  %591 = vadd.xlane.f32.xlu0 %v590
  %v592 = vpop.xlane.xlu0 %591
  %v593 = vrcp.pop %v589
  %v594 = vrcp.pop %v592
  %v595 = vmul.f32 %v584, %v593
  %v596 = vmul.f32 %v586, %v594
  %597 = vrot.lane.b32.xlu0 %v129, 104
  %v598 = vpop.permute.xlu0 %597
  %v601 = vsel %vm137, %v595, 0
  %603 = vmatpush.msra.mxu0 0.0
  %604 = vmatpush.msra.mxu0 0.0
  %605 = vmatpush.msra.mxu0 0.0
  %606 = vmatpush.msra.mxu0 0.0
  %607 = vmatpush.msra.mxu0 0.0
  %608 = vmatpush.msra.mxu0 0.0
  %609 = vmatpush.msra.mxu0 0.0
  %610 = vmatpush.msra.mxu0 0.0
  %611 = vmatpush.msra.mxu0 0.0
  %612 = vmatpush.msra.mxu0 0.0
  %613 = vmatpush.msra.mxu0 0.0
  %614 = vmatpush.msra.mxu0 0.0
  %615 = vmatpush.msra.mxu0 0.0
  %616 = vmatpush.msra.mxu0 0.0
  %617 = vmatpush.msra.mxu0 0.0
  %618 = vmatpush.msra.mxu0 %v598
  %619 = vmatmul.f32.gmra.mxu0 %v601
  %v620 = vpop.f32.mrf.mxu0
  %v621 = vadd.f32 0.0, %v620
  %622 = vdwg.mxu0
  %623 = vrot.lane.b32.xlu0 %v132, 104
  %v624 = vpop.permute.xlu0 %623
  %v627 = vsel %vm137, %v596, 0
  %629 = vmatpush.msra.mxu0 0.0
  %630 = vmatpush.msra.mxu0 0.0
  %631 = vmatpush.msra.mxu0 0.0
  %632 = vmatpush.msra.mxu0 0.0
  %633 = vmatpush.msra.mxu0 0.0
  %634 = vmatpush.msra.mxu0 0.0
  %635 = vmatpush.msra.mxu0 0.0
  %636 = vmatpush.msra.mxu0 0.0
  %637 = vmatpush.msra.mxu0 0.0
  %638 = vmatpush.msra.mxu0 0.0
  %639 = vmatpush.msra.mxu0 0.0
  %640 = vmatpush.msra.mxu0 0.0
  %641 = vmatpush.msra.mxu0 0.0
  %642 = vmatpush.msra.mxu0 0.0
  %643 = vmatpush.msra.mxu0 0.0
  %644 = vmatpush.msra.mxu0 %v624
  %645 = vmatmul.f32.gmra.mxu0 %v627
  %v646 = vpop.f32.mrf.mxu0
  %v647 = vadd.f32 0.0, %v646
  %648 = vdwg.mxu0
  %651 = vrot.lane.b32.xlu0 %v360, 8
  %v652 = vpop.permute.xlu0 %651
  %653 = vrot.lane.b32.xlu0 %v387, 8
  %v654 = vpop.permute.xlu0 %653
  %659 = vrot.lane.b32.xlu0 %v491, 16
  %v660 = vpop.permute.xlu0 %659
  %661 = vrot.lane.b32.xlu0 %v517, 16
  %v662 = vpop.permute.xlu0 %661
  %667 = vrot.lane.b32.xlu0 %v621, 24
  %v668 = vpop.permute.xlu0 %667
  %669 = vrot.lane.b32.xlu0 %v647, 24
  %v670 = vpop.permute.xlu0 %669
  %v673 = vsel %vm137, %v232, %v652
  %v674 = vsel %vm137, %v255, %v654
  %vm675 = vcmask 130048
  %v676 = vsel %vm675, %v673, %v660
  %v677 = vsel %vm675, %v674, %v662
  %vm678 = vcmask 195584
  %v679 = vsel %vm678, %v676, %v668
  %v680 = vsel %vm678, %v677, %v670
  %v681 = vld [vmem:[%s6] sm:$0xff]
  %v682 = vld [vmem:[%s6 + $0x8] sm:$0xff]
  %v683 = vld [vmem:[%s6 + $0x10] sm:$0xff]
  %v684 = vld [vmem:[%s6 + $0x18] sm:$0xff]
  %v685 = vld [vmem:[%s7] sm:$0x1]
  %v687 = vperm.slane %v685, 0
  %v690 = vsel %vm67, %v679, 0
  %v693 = vsel %vm67, %v680, 0
  %695 = vmatpush.msra.mxu0 0.0
  %696 = vmatpush.msra.mxu0 0.0
  %697 = vmatpush.msra.mxu0 0.0
  %698 = vmatpush.msra.mxu0 0.0
  %699 = vmatpush.msra.mxu0 0.0
  %700 = vmatpush.msra.mxu0 0.0
  %701 = vmatpush.msra.mxu0 0.0
  %702 = vmatpush.msra.mxu0 0.0
  %703 = vmatpush.msra.mxu0 0.0
  %704 = vmatpush.msra.mxu0 0.0
  %705 = vmatpush.msra.mxu0 0.0
  %706 = vmatpush.msra.mxu0 0.0
  %707 = vmatpush.msra.mxu0 %v684
  %708 = vmatpush.msra.mxu0 %v683
  %709 = vmatpush.msra.mxu0 %v682
  %710 = vmatpush.msra.mxu0 %v681
  %711 = vmatmul.f32.gmra.mxu0 %v690
  %v712 = vpop.f32.mrf.mxu0
  %v713 = vadd.f32 %v687, %v712
  %714 = vmatmul.f32.gmra.mxu0 %v693
  %v715 = vpop.f32.mrf.mxu0
  %v716 = vadd.f32 %v687, %v715
  %717 = vdwg.mxu0
  %v718 = vadd.f32 %v53, %v713
  %v719 = vadd.f32 %v54, %v716
  %v720 = vld [vmem:[%s12] sm:$0x1]
  %v721 = vld [vmem:[%s13] sm:$0x1]
  %v722 = vsel %vm67, %v718, 0.0
  %723 = vadd.xlane.f32.xlu0 %v722
  %v724 = vpop.xlane.xlu0 %723
  %v725 = vsel %vm67, %v719, 0.0
  %726 = vadd.xlane.f32.xlu0 %v725
  %v727 = vpop.xlane.xlu0 %726
  %v728 = vrcp.pop 32.0
  %v729 = vmul.f32 32.0, %v728
  %v730 = vsub.f32 1.0, %v729
  %v731 = vmul.f32 %v728, %v730
  %v732 = vadd.f32 %v728, %v731
  %vm733 = vweird.f32 %v728
  %v734 = vsel %vm733, %v728, %v732
  %v735 = vmul.f32 %v724, %v734
  %v736 = vmul.f32 %v727, %v734
  %v737 = vsub.f32 %v718, %v735
  %v738 = vsub.f32 %v719, %v736
  %v739 = vmul.f32 %v737, %v737
  %v740 = vmul.f32 %v738, %v738
  %v741 = vsel %vm67, %v739, 0.0
  %742 = vadd.xlane.f32.xlu0 %v741
  %v743 = vpop.xlane.xlu0 %742
  %v744 = vsel %vm67, %v740, 0.0
  %745 = vadd.xlane.f32.xlu0 %v744
  %v746 = vpop.xlane.xlu0 %745
  %v747 = vmul.f32 %v743, %v734
  %v748 = vmul.f32 %v746, %v734
  %v749 = vadd.f32 %v747, 1e-05
  %v750 = vadd.f32 %v748, 1e-05
  %v751 = vrsqrt.pop %v749
  %v752 = vmul.f32 %v751, %v749
  %v753 = vmul.f32 %v752, %v751
  %v754 = vmul.f32 0.5, %v753
  %v755 = vsub.f32 1.5, %v754
  %v756 = vmul.f32 %v751, %v755
  %vm757 = vweird.f32 %v749
  %vm758 = vweird.f32 %v751
  %vm759 = vmor %vm757, %vm758
  %v760 = vsel %vm759, %v751, %v756
  %v761 = vrsqrt.pop %v750
  %v762 = vmul.f32 %v761, %v750
  %v763 = vmul.f32 %v762, %v761
  %v764 = vmul.f32 0.5, %v763
  %v765 = vsub.f32 1.5, %v764
  %v766 = vmul.f32 %v761, %v765
  %vm767 = vweird.f32 %v750
  %vm768 = vweird.f32 %v761
  %vm769 = vmor %vm767, %vm768
  %v770 = vsel %vm769, %v761, %v766
  %v771 = vmul.f32 %v737, %v760
  %v772 = vmul.f32 %v738, %v770
  %v774 = vperm.slane %v720, 0
  %v776 = vmul.f32 %v771, %v774
  %v777 = vmul.f32 %v772, %v774
  %v779 = vperm.slane %v721, 0
  %v781 = vadd.f32 %v776, %v779
  %v782 = vadd.f32 %v777, %v779
  %v783 = vld [vmem:[%s8] sm:$0xff]
  %v784 = vld [vmem:[%s8 + $0x8] sm:$0xff]
  %v785 = vld [vmem:[%s8 + $0x10] sm:$0xff]
  %v786 = vld [vmem:[%s8 + $0x18] sm:$0xff]
  %v787 = vld [vmem:[%s9] sm:$0x1]
  %v789 = vperm.slane %v787, 0
  %v792 = vsel %vm67, %v781, 0
  %v795 = vsel %vm67, %v782, 0
  %797 = vmatpush.msra.mxu0 0.0
  %798 = vmatpush.msra.mxu0 0.0
  %799 = vmatpush.msra.mxu0 0.0
  %800 = vmatpush.msra.mxu0 0.0
  %801 = vmatpush.msra.mxu0 0.0
  %802 = vmatpush.msra.mxu0 0.0
  %803 = vmatpush.msra.mxu0 0.0
  %804 = vmatpush.msra.mxu0 0.0
  %805 = vmatpush.msra.mxu0 0.0
  %806 = vmatpush.msra.mxu0 0.0
  %807 = vmatpush.msra.mxu0 0.0
  %808 = vmatpush.msra.mxu0 0.0
  %809 = vmatpush.msra.mxu0 %v786
  %810 = vmatpush.msra.mxu0 %v785
  %811 = vmatpush.msra.mxu0 %v784
  %812 = vmatpush.msra.mxu0 %v783
  %813 = vmatmul.f32.gmra.mxu0 %v792
  %v814 = vpop.f32.mrf.mxu0
  %v815 = vadd.f32 %v789, %v814
  %816 = vmatmul.f32.gmra.mxu0 %v795
  %v817 = vpop.f32.mrf.mxu0
  %v818 = vadd.f32 %v789, %v817
  %819 = vdwg.mxu0
  %v820 = vmax.f32 %v815, 0.0
  %v821 = vmax.f32 %v818, 0.0
  %v822 = vld [vmem:[%s10] sm:$0xff]
  %v823 = vld [vmem:[%s10 + $0x8] sm:$0xff]
  %v824 = vld [vmem:[%s10 + $0x10] sm:$0xff]
  %v825 = vld [vmem:[%s10 + $0x18] sm:$0xff]
  %v826 = vld [vmem:[%s10 + $0x20] sm:$0xff]
  %v827 = vld [vmem:[%s10 + $0x28] sm:$0xff]
  %v828 = vld [vmem:[%s10 + $0x30] sm:$0xff]
  %v829 = vld [vmem:[%s10 + $0x38] sm:$0xff]
  %v830 = vld [vmem:[%s11] sm:$0x1]
  %v832 = vperm.slane %v830, 0
  %vm834 = vcmask 523264
  %v836 = vsel %vm834, %v820, 0
  %v839 = vsel %vm834, %v821, 0
  %841 = vmatpush.msra.mxu0 0.0
  %842 = vmatpush.msra.mxu0 0.0
  %843 = vmatpush.msra.mxu0 0.0
  %844 = vmatpush.msra.mxu0 0.0
  %845 = vmatpush.msra.mxu0 0.0
  %846 = vmatpush.msra.mxu0 0.0
  %847 = vmatpush.msra.mxu0 0.0
  %848 = vmatpush.msra.mxu0 0.0
  %849 = vmatpush.msra.mxu0 %v829
  %850 = vmatpush.msra.mxu0 %v828
  %851 = vmatpush.msra.mxu0 %v827
  %852 = vmatpush.msra.mxu0 %v826
  %853 = vmatpush.msra.mxu0 %v825
  %854 = vmatpush.msra.mxu0 %v824
  %855 = vmatpush.msra.mxu0 %v823
  %856 = vmatpush.msra.mxu0 %v822
  %857 = vmatmul.f32.gmra.mxu0 %v836
  %v858 = vpop.f32.mrf.mxu0
  %v859 = vadd.f32 %v832, %v858
  %860 = vmatmul.f32.gmra.mxu0 %v839
  %v861 = vpop.f32.mrf.mxu0
  %v862 = vadd.f32 %v832, %v861
  %863 = vdwg.mxu0
  %v864 = vadd.f32 %v781, %v859
  %v865 = vadd.f32 %v782, %v862
  %v866 = vld [vmem:[%s14] sm:$0x1]
  %v867 = vld [vmem:[%s15] sm:$0x1]
  %v868 = vsel %vm67, %v864, 0.0
  %869 = vadd.xlane.f32.xlu0 %v868
  %v870 = vpop.xlane.xlu0 %869
  %v871 = vsel %vm67, %v865, 0.0
  %872 = vadd.xlane.f32.xlu0 %v871
  %v873 = vpop.xlane.xlu0 %872
  %v874 = vmul.f32 %v870, %v734
  %v875 = vmul.f32 %v873, %v734
  %v876 = vsub.f32 %v864, %v874
  %v877 = vsub.f32 %v865, %v875
  %v878 = vmul.f32 %v876, %v876
  %v879 = vmul.f32 %v877, %v877
  %v880 = vsel %vm67, %v878, 0.0
  %881 = vadd.xlane.f32.xlu0 %v880
  %v882 = vpop.xlane.xlu0 %881
  %v883 = vsel %vm67, %v879, 0.0
  %884 = vadd.xlane.f32.xlu0 %v883
  %v885 = vpop.xlane.xlu0 %884
  %v886 = vmul.f32 %v882, %v734
  %v887 = vmul.f32 %v885, %v734
  %v888 = vadd.f32 %v886, 1e-05
  %v889 = vadd.f32 %v887, 1e-05
  %v890 = vrsqrt.pop %v888
  %v891 = vmul.f32 %v890, %v888
  %v892 = vmul.f32 %v891, %v890
  %v893 = vmul.f32 0.5, %v892
  %v894 = vsub.f32 1.5, %v893
  %v895 = vmul.f32 %v890, %v894
  %vm896 = vweird.f32 %v888
  %vm897 = vweird.f32 %v890
  %vm898 = vmor %vm896, %vm897
  %v899 = vsel %vm898, %v890, %v895
  %v900 = vrsqrt.pop %v889
  %v901 = vmul.f32 %v900, %v889
  %v902 = vmul.f32 %v901, %v900
  %v903 = vmul.f32 0.5, %v902
  %v904 = vsub.f32 1.5, %v903
  %v905 = vmul.f32 %v900, %v904
  %vm906 = vweird.f32 %v889
  %vm907 = vweird.f32 %v900
  %vm908 = vmor %vm906, %vm907
  %v909 = vsel %vm908, %v900, %v905
  %v910 = vmul.f32 %v876, %v899
  %v911 = vmul.f32 %v877, %v909
  %v913 = vperm.slane %v866, 0
  %v915 = vmul.f32 %v910, %v913
  %v916 = vmul.f32 %v911, %v913
  %v918 = vperm.slane %v867, 0
  %v920 = vadd.f32 %v915, %v918
  %v921 = vadd.f32 %v916, %v918
  %922 = vst.msk [vmem:[%s16] sm:$0xff] %vm67, %v920
  %923 = vst.msk [vmem:[%s16 + $0x8] sm:$0xff] %vm67, %v921
  // Predicated region
  $region66: #{transformer_encoder_layer.1} parent=0 // pred_check
    _
  $region67: #{transformer_encoder_layer.1} parent=0 // pred_check_branch
    %925 = sbr.rel (0) target = $region69
  $region68: #{transformer_encoder_layer.1} parent=0 // pred_region
    _
  $region69: #{transformer_encoder_layer.1} parent=0 // pred_fallthru
    _
  // Predicated region
  $region70: #{transformer_encoder_layer.1} parent=0 // pred_check
    _
  $region71: #{transformer_encoder_layer.1} parent=0 // pred_check_branch
    %927 = sbr.rel (0) target = $region73
  $region72: #{transformer_encoder_layer.1} parent=0 // pred_region
    _
  $region73: #{transformer_encoder_layer.1} parent=0 // pred_fallthru
    _

</llo_original>
